<compile_context>
chip_gen: v5e
topology: v5e:2x2
jax: 0.10.0
libtpu: 0.0.40
codegen_flags: <defaults>
</compile_context>

<pallas_src>
import functools

import jax
import jax.numpy as jnp
import numpy as np
from jax import lax
from jax.experimental import pallas as pl
from jax.experimental.pallas import tpu as pltpu

NEG_INF = -1e9       # additive mask value (matches key_padding_mask=True)
LN_EPS = 1e-5        # PyTorch LayerNorm default eps


# ----------------------------------------------------------------------------
# Linear projection kernel: [M, D_in] @ [D_in, E] + b  (single lane-dense matmul)
# ----------------------------------------------------------------------------
def _linear_kernel(x_ref, w_ref, b_ref, o_ref):
    o_ref[...] = (jnp.dot(x_ref[...], w_ref[...],
                          preferred_element_type=jnp.float32)
                  + b_ref[...]).astype(o_ref.dtype)


def _linear(x, w_t, b):
    """x: [M, D_in], w_t: [D_in, E], b: [1, E] -> [M, E] (f32)."""
    M, D_in = x.shape
    E = w_t.shape[1]
    return pl.pallas_call(
        _linear_kernel,
        out_shape=jax.ShapeDtypeStruct((M, E), jnp.float32),
        grid_spec=pltpu.PrefetchScalarGridSpec(
            num_scalar_prefetch=0,
            grid=(1,),
            in_specs=[
                pl.BlockSpec((M, D_in), lambda i: (0, 0)),
                pl.BlockSpec((D_in, E), lambda i: (0, 0)),
                pl.BlockSpec((1, E), lambda i: (0, 0)),
            ],
            out_specs=pl.BlockSpec((M, E), lambda i: (0, 0)),
        ),
        compiler_params=pltpu.CompilerParams(
            dimension_semantics=("arbitrary",)),
    )(x, w_t, b)


# ----------------------------------------------------------------------------
# Fused cross-attention block kernel: MHA + residual + LayerNorm, one batch
# element per grid step (all heads handled inside, unrolled).
# ----------------------------------------------------------------------------
def _cross_attn_kernel(q_ref, ctx_ref, mask_ref, wq_ref, bq_ref, wkv_ref,
                       bkv_ref, wo_ref, bo_ref, g_ref, beta_ref, o_ref,
                       *, num_heads):
    """
    q_ref:    (1, Lq, E)   projected query (also the residual input)
    ctx_ref:  (1, Lk, E)   projected context (keys/values source)
    mask_ref: (1, 1, Lk)   additive key-padding mask (0 or NEG_INF)
    wq_ref:   (E, E)       Q projection weight (x @ W layout)
    bq_ref:   (1, E)
    wkv_ref:  (E, 2E)      fused [K | V] projection weight
    bkv_ref:  (1, 2E)
    wo_ref:   (E, E)       output projection weight (x @ W layout)
    bo_ref:   (1, E)
    g_ref:    (1, E)       LayerNorm gamma
    beta_ref: (1, E)       LayerNorm beta
    o_ref:    (1, Lq, E)
    """
    E = q_ref.shape[2]
    Dh = E // num_heads
    scale = 1.0 / np.sqrt(Dh)

    q_in = q_ref[0]              # [Lq, E]   (residual input)
    ctx = ctx_ref[0]             # [Lk, E]
    mask = mask_ref[0]           # [1, Lk]   additive

    # Q projection (one matmul) and fused K|V projection (one matmul).
    q = jnp.dot(q_in, wq_ref[...], preferred_element_type=jnp.float32) + bq_ref[...]
    q = q * scale                                                  # scale once
    kv = jnp.dot(ctx, wkv_ref[...], preferred_element_type=jnp.float32) + bkv_ref[...]
    k = kv[:, :E]                # [Lk, E]
    v = kv[:, E:]                # [Lk, E]

    # Per-head attention with static lane slices; heads re-concatenated so the
    # out-projection input and the final store stay lane-dense (width E).
    head_outs = []
    for h in range(num_heads):
        sl = slice(h * Dh, (h + 1) * Dh)
        s = lax.dot_general(q[:, sl], k[:, sl], (((1,), (1,)), ((), ())),
                            preferred_element_type=jnp.float32)    # [Lq, Lk]
        s = s + mask
        s = s - jnp.max(s, axis=-1, keepdims=True)
        p = jnp.exp(s)
        p = p * pl.reciprocal(jnp.sum(p, axis=-1, keepdims=True), approx=False)
        head_outs.append(jnp.dot(p, v[:, sl],
                                 preferred_element_type=jnp.float32))
    attn = jnp.concatenate(head_outs, axis=-1)                     # [Lq, E]

    # Output projection + residual + LayerNorm (all in VMEM).
    out = jnp.dot(attn, wo_ref[...], preferred_element_type=jnp.float32) + bo_ref[...]
    y = q_in + out
    mu = jnp.mean(y, axis=-1, keepdims=True)
    var = jnp.mean(jnp.square(y - mu), axis=-1, keepdims=True)
    y_n = (y - mu) * lax.rsqrt(var + LN_EPS)
    o_ref[0] = (y_n * g_ref[...] + beta_ref[...]).astype(o_ref.dtype)


def _cross_attn_block(query, context, mask_bool, p, num_heads):
    """query: [B, Lq, E], context: [B, Lk, E], mask_bool: [B, Lk] bool or None."""
    B, Lq, E = query.shape
    Lk = context.shape[1]

    # PyTorch MultiheadAttention parameter layout -> x @ W layout (plain-JAX glue,
    # runs once per call on small [E,*] weights).
    in_w, in_b = p["in_proj_w"], p["in_proj_b"]
    wq = in_w[:E].T                                                   # [E, E]
    wkv = jnp.concatenate([in_w[E:2 * E].T, in_w[2 * E:].T], axis=1)  # [E, 2E]
    bq = in_b[:E].reshape(1, E)
    bkv = in_b[E:].reshape(1, 2 * E)
    wo = p["out_w"].T                                                 # [E, E]
    bo = p["out_b"].reshape(1, E)
    g = p["ln_g"].reshape(1, E)
    beta = p["ln_b"].reshape(1, E)

    if mask_bool is None:
        mask_add = jnp.zeros((B, 1, Lk), jnp.float32)
    else:
        mask_add = jnp.where(mask_bool, NEG_INF, 0.0).astype(jnp.float32)
        mask_add = mask_add.reshape(B, 1, Lk)

    kernel = functools.partial(_cross_attn_kernel, num_heads=num_heads)
    return pl.pallas_call(
        kernel,
        out_shape=jax.ShapeDtypeStruct((B, Lq, E), jnp.float32),
        grid_spec=pltpu.PrefetchScalarGridSpec(
            num_scalar_prefetch=0,
            grid=(B,),
            in_specs=[
                pl.BlockSpec((1, Lq, E), lambda b: (b, 0, 0)),
                pl.BlockSpec((1, Lk, E), lambda b: (b, 0, 0)),
                pl.BlockSpec((1, 1, Lk), lambda b: (b, 0, 0)),
                pl.BlockSpec((E, E), lambda b: (0, 0)),
                pl.BlockSpec((1, E), lambda b: (0, 0)),
                pl.BlockSpec((E, 2 * E), lambda b: (0, 0)),
                pl.BlockSpec((1, 2 * E), lambda b: (0, 0)),
                pl.BlockSpec((E, E), lambda b: (0, 0)),
                pl.BlockSpec((1, E), lambda b: (0, 0)),
                pl.BlockSpec((1, E), lambda b: (0, 0)),
                pl.BlockSpec((1, E), lambda b: (0, 0)),
            ],
            out_specs=pl.BlockSpec((1, Lq, E), lambda b: (b, 0, 0)),
        ),
        compiler_params=pltpu.CompilerParams(
            dimension_semantics=("parallel",)),
    )(query, context, mask_add, wq, bq, wkv, bkv, wo, bo, g, beta)


# ----------------------------------------------------------------------------
# Full module forward
# ----------------------------------------------------------------------------
def bidirectional_cross_attention_forward(text_seq, audio_seq, params,
                                          audio_mask=None, text_mask=None,
                                          num_heads=4):
    """text_seq: [B, Lt, text_dim], audio_seq: [B, La, audio_dim].
    Returns (text_attn [B, Lt, E], audio_attn [B, La, E])."""
    B, Lt, Dt = text_seq.shape
    _, La, Da = audio_seq.shape
    E = params["text_proj_w"].shape[0]

    # Shared-dim projections: one lane-dense matmul each over B*L rows.
    text = _linear(text_seq.reshape(B * Lt, Dt),
                   params["text_proj_w"].T,
                   params["text_proj_b"].reshape(1, E)).reshape(B, Lt, E)
    audio = _linear(audio_seq.reshape(B * La, Da),
                    params["audio_proj_w"].T,
                    params["audio_proj_b"].reshape(1, E)).reshape(B, La, E)

    text_attn = _cross_attn_block(text, audio, audio_mask, params["t2a"], num_heads)
    audio_attn = _cross_attn_block(audio, text, text_mask, params["a2t"], num_heads)
    return text_attn, audio_attn


# ----------------------------------------------------------------------------
# Pure-JAX reference (mirrors the PyTorch module, eval mode)
# ----------------------------------------------------------------------------
def _mha_ref(q, ctx, in_w, in_b, out_w, out_b, mask_add, num_heads):
    P = lax.Precision.HIGHEST
    E = q.shape[-1]
    Dh = E // num_heads
    wq, wk, wv = in_w[:E], in_w[E:2 * E], in_w[2 * E:]
    bq, bk, bv = in_b[:E], in_b[E:2 * E], in_b[2 * E:]
    qp = jnp.einsum("bld,ed->ble", q, wq, precision=P) + bq
    kp = jnp.einsum("bld,ed->ble", ctx, wk, precision=P) + bk
    vp = jnp.einsum("bld,ed->ble", ctx, wv, precision=P) + bv
    B, Lq, _ = qp.shape
    Lk = kp.shape[1]
    qh = qp.reshape(B, Lq, num_heads, Dh)
    kh = kp.reshape(B, Lk, num_heads, Dh)
    vh = vp.reshape(B, Lk, num_heads, Dh)
    s = jnp.einsum("bqhd,bkhd->bhqk", qh, kh, precision=P) / np.sqrt(Dh)
    s = s + mask_add[:, :, None, :]                 # [B,1,1,Lk] broadcast
    p = jax.nn.softmax(s, axis=-1)
    o = jnp.einsum("bhqk,bkhd->bqhd", p, vh, precision=P).reshape(B, Lq, E)
    return jnp.einsum("ble,oe->blo", o, out_w, precision=P) + out_b


def _ln_ref(x, g, b):
    mu = jnp.mean(x, axis=-1, keepdims=True)
    var = jnp.mean(jnp.square(x - mu), axis=-1, keepdims=True)
    return (x - mu) * lax.rsqrt(var + LN_EPS) * g + b


def _reference_forward(text_seq, audio_seq, params, audio_mask=None,
                       text_mask=None, num_heads=4):
    P = lax.Precision.HIGHEST
    B, Lt, _ = text_seq.shape
    La = audio_seq.shape[1]
    text = (jnp.einsum("bld,ed->ble", text_seq, params["text_proj_w"], precision=P)
            + params["text_proj_b"])
    audio = (jnp.einsum("bld,ed->ble", audio_seq, params["audio_proj_w"], precision=P)
             + params["audio_proj_b"])

    def add_mask(m, L):
        if m is None:
            return jnp.zeros((B, 1, L), jnp.float32)
        return jnp.where(m, NEG_INF, 0.0).astype(jnp.float32).reshape(B, 1, L)

    am = add_mask(audio_mask, La)
    tm = add_mask(text_mask, Lt)

    t2a, a2t = params["t2a"], params["a2t"]
    ta = _mha_ref(text, audio, t2a["in_proj_w"], t2a["in_proj_b"],
                  t2a["out_w"], t2a["out_b"], am, num_heads)
    text_attn = _ln_ref(text + ta, t2a["ln_g"], t2a["ln_b"])
    at = _mha_ref(audio, text, a2t["in_proj_w"], a2t["in_proj_b"],
                  a2t["out_w"], a2t["out_b"], tm, num_heads)
    audio_attn = _ln_ref(audio + at, a2t["ln_g"], a2t["ln_b"])
    return text_attn, audio_attn


# ----------------------------------------------------------------------------
if __name__ == "__main__":
    B, Lt, La = 2, 8, 16
    TEXT_DIM, AUDIO_DIM, E, H = 32, 48, 256, 4

    key = jax.random.PRNGKey(0)
    keys = jax.random.split(key, 16)

    def u(k, shape, fan_in):
        bound = 1.0 / np.sqrt(fan_in)
        return jax.random.uniform(k, shape, jnp.float32, -bound, bound)

    def attn_params(ks):
        return {
            "in_proj_w": u(ks[0], (3 * E, E), E),     # PyTorch MHA layout [3E, E]
            "in_proj_b": u(ks[1], (3 * E,), E),
            "out_w": u(ks[2], (E, E), E),             # out_proj.weight [E, E]
            "out_b": u(ks[3], (E,), E),
            "ln_g": (jnp.ones((E,), jnp.float32)
                     + 0.05 * jax.random.normal(ks[4], (E,), jnp.float32)),
            "ln_b": 0.05 * jax.random.normal(ks[5], (E,), jnp.float32),
        }

    params = {
        "text_proj_w": u(keys[0], (E, TEXT_DIM), TEXT_DIM),   # Linear weight [out, in]
        "text_proj_b": u(keys[1], (E,), TEXT_DIM),
        "audio_proj_w": u(keys[2], (E, AUDIO_DIM), AUDIO_DIM),
        "audio_proj_b": u(keys[3], (E,), AUDIO_DIM),
        "t2a": attn_params(keys[4:10]),
        "a2t": attn_params(keys[10:16]),
    }

    text_seq = jax.random.normal(jax.random.PRNGKey(1), (B, Lt, TEXT_DIM), jnp.float32)
    audio_seq = jax.random.normal(jax.random.PRNGKey(2), (B, La, AUDIO_DIM), jnp.float32)

    # key_padding_mask semantics: True = padded / ignored position.
    audio_lens = jnp.array([La, 12])
    audio_mask = jnp.arange(La)[None, :] >= audio_lens[:, None]   # [B, La] bool
    text_mask = None

    text_attn, audio_attn = jax.block_until_ready(
        bidirectional_cross_attention_forward(
            text_seq, audio_seq, params,
            audio_mask=audio_mask, text_mask=text_mask, num_heads=H))

    text_ref, audio_ref = _reference_forward(
        text_seq, audio_seq, params,
        audio_mask=audio_mask, text_mask=text_mask, num_heads=H)

    np.testing.assert_allclose(np.asarray(text_attn), np.asarray(text_ref),
                               rtol=2e-4, atol=2e-4)
    np.testing.assert_allclose(np.asarray(audio_attn), np.asarray(audio_ref),
                               rtol=2e-4, atol=2e-4)
    assert text_attn.shape == (B, Lt, E)
    assert audio_attn.shape == (B, La, E)

    print("KERNEL_OK")
</pallas_src>

<mosaic_0001>
module attributes {stable_mosaic.version = 11 : i64} {
  func.func @_linear_kernel(%arg0: i32, %arg1: memref<16x32xf32, #tpu.memory_space<vmem>>, %arg2: memref<32x256xf32, #tpu.memory_space<vmem>>, %arg3: memref<1x256xf32, #tpu.memory_space<vmem>>, %arg4: memref<16x256xf32, #tpu.memory_space<vmem>>) attributes {dimension_semantics = [#tpu.dimension_semantics<arbitrary>], iteration_bounds = array<i64: 1>, scalar_prefetch = 0 : i64, scratch_operands = 0 : i64, tpu.core_type = #tpu.core_type<tc>, window_params = [{pipeline_mode = #tpu.pipeline_mode<synchronous>, transform_indices = @transform_0, window_bounds = array<i64: 16, 32>}, {pipeline_mode = #tpu.pipeline_mode<synchronous>, transform_indices = @transform_1, window_bounds = array<i64: 32, 256>}, {pipeline_mode = #tpu.pipeline_mode<synchronous>, transform_indices = @transform_2, window_bounds = array<i64: 1, 256>}, {pipeline_mode = #tpu.pipeline_mode<synchronous>, transform_indices = @transform_3, window_bounds = array<i64: 16, 256>}]} {
    %c0 = arith.constant 0 : index
    %c0_0 = arith.constant 0 : index
    %0 = vector.load %arg1[%c0, %c0_0] : memref<16x32xf32, #tpu.memory_space<vmem>>, vector<16x32xf32>
    %c0_1 = arith.constant 0 : index
    %c0_2 = arith.constant 0 : index
    %1 = vector.load %arg2[%c0_1, %c0_2] : memref<32x256xf32, #tpu.memory_space<vmem>>, vector<32x256xf32>
    %cst = arith.constant dense<0.000000e+00> : vector<16x256xf32>
    %2 = tpu.matmul %0, %1, %cst {dimension_numbers = #tpu.dot_dimension_numbers<[1], [0], [0], [1], [0, 0, 1, 1], [], []>} : vector<16x32xf32>, vector<32x256xf32>, vector<16x256xf32> -> vector<16x256xf32>
    %c0_3 = arith.constant 0 : index
    %c0_4 = arith.constant 0 : index
    %3 = vector.load %arg3[%c0_3, %c0_4] : memref<1x256xf32, #tpu.memory_space<vmem>>, vector<1x256xf32>
    %4 = vector.broadcast %3 : vector<1x256xf32> to vector<16x256xf32>
    %5 = arith.addf %2, %4 : vector<16x256xf32>
    %c0_5 = arith.constant 0 : index
    %c0_6 = arith.constant 0 : index
    %6 = vector.load %arg4[%c0_5, %c0_6] : memref<16x256xf32, #tpu.memory_space<vmem>>, vector<16x256xf32>
    tpu.vector_store %arg4[%c0_5, %c0_6], %5 {strides = array<i32>} : memref<16x256xf32, #tpu.memory_space<vmem>>, vector<16x256xf32>,
    return
  }
  func.func @transform_0(%arg0: i32) -> (i32, i32) {
    %c0_i32 = arith.constant 0 : i32
    %c0_i32_0 = arith.constant 0 : i32
    %c0_i32_1 = arith.constant 0 : i32
    return %c0_i32, %c0_i32_0 : i32, i32
  }
  func.func @transform_1(%arg0: i32) -> (i32, i32) {
    %c0_i32 = arith.constant 0 : i32
    %c0_i32_0 = arith.constant 0 : i32
    %c0_i32_1 = arith.constant 0 : i32
    return %c0_i32, %c0_i32_0 : i32, i32
  }
  func.func @transform_2(%arg0: i32) -> (i32, i32) {
    %c0_i32 = arith.constant 0 : i32
    %c0_i32_0 = arith.constant 0 : i32
    %c0_i32_1 = arith.constant 0 : i32
    return %c0_i32, %c0_i32_0 : i32, i32
  }
  func.func @transform_3(%arg0: i32) -> (i32, i32) {
    %c0_i32 = arith.constant 0 : i32
    %c0_i32_0 = arith.constant 0 : i32
    %c0_i32_1 = arith.constant 0 : i32
    return %c0_i32, %c0_i32_0 : i32, i32
  }
}

</mosaic_0001>

<llo_original>
// kernel: tpu_custom_call.1
$region0: #{tpu_custom_call.1}
  #allocation0 [shape = 'u32[]', space=smem, size = 0x4, offset = 0x4, fixed_abs, tag = 'smem constant byte address 0x4 - core index']
  #allocation1 [shape = 'u32[72,128]{1,0:T(1,128)}', space=vmem, size = 0x9000, scoped, tag = 'internal scratch']
  %s0 = inlined_call_operand.hbm [shape: f32[16,32], index: 0, kind: input, shape index: {}]
  %s1 = inlined_call_operand.hbm [shape: f32[32,256], index: 1, kind: input, shape index: {}]
  %s2 = inlined_call_operand.hbm [shape: f32[1,256], index: 2, kind: input, shape index: {}]
  %s3 = inlined_call_operand.hbm [shape: f32[16,256], index: 3, kind: output, shape index: {}]
  %s4 = sld [smem:[#allocation0]]
  $region34: #{tpu_custom_call.1} parent=0
    _
  %s6 = ssub.s32 1, %s4
  %s7 = scalar_select 0, %s6, %s4
  $region1: #{tpu_custom_call.1} parent=0
    #allocation2 [shape = 'u8[8192]{0}', space=vmem, size = 0x2000, scoped, tag = 'input window, operand 0, single buffered']
    #allocation3 [shape = 's32[1]{0}', space=sflag, size = 0x4, scoped, tag = 'scoped memory for tpu_custom_call.1']
    #allocation4 [shape = 's32[1]{0}', space=sflag, size = 0x4, scoped, tag = 'scoped memory for tpu_custom_call.1']
    #allocation5 [shape = 'u8[32768]{0}', space=vmem, size = 0x8000, scoped, tag = 'input window, operand 1, single buffered']
    #allocation6 [shape = 's32[1]{0}', space=sflag, size = 0x4, scoped, tag = 'scoped memory for tpu_custom_call.1']
    #allocation7 [shape = 'u8[1024]{0}', space=vmem, size = 0x400, scoped, tag = 'input window, operand 2, single buffered']
    #allocation8 [shape = 'u8[16384]{0}', space=vmem, size = 0x4000, scoped, tag = 'output window, operand 0, single buffered']
    %8 = vsyncpa [#allocation3], 0
    %9 = vsyncpa [#allocation6], 0
    %10 = vsyncpa [#allocation4], 0
    // Predicated region
    $region2: #{tpu_custom_call.1} parent=1 // pred_check
      _
    $region3: #{tpu_custom_call.1} parent=1 // pred_check_branch
      %12 = sbr.rel (0) target = $region5
    $region4: #{tpu_custom_call.1} parent=1 // pred_region
      %14 = vsyncadd [#allocation3], 0
      %s15 = sshll.u32 %s0, 4
      %s16 = int_to_ptr.hbm [resolvable:$true] %s15
      %s17 = sshll.u32 [#allocation2], 4
      %s18 = int_to_ptr.vmem [resolvable:$true] %s17
      %23 = dma.hbm_to_vmem [thread:$0]  %s16, 256, %s18, [#allocation3], 128, 128, 8
    $region5: #{tpu_custom_call.1} parent=1 // pred_fallthru
      _
    // Predicated region
    $region6: #{tpu_custom_call.1} parent=1 // pred_check
      _
    $region7: #{tpu_custom_call.1} parent=1 // pred_check_branch
      %25 = sbr.rel (0) target = $region9
    $region8: #{tpu_custom_call.1} parent=1 // pred_region
      %27 = vsyncadd [#allocation6], 0
      %s28 = sshll.u32 %s1, 4
      %s29 = int_to_ptr.hbm [resolvable:$true] %s28
      %s30 = sshll.u32 [#allocation5], 4
      %s31 = int_to_ptr.vmem [resolvable:$true] %s30
      %36 = dma.hbm_to_vmem [thread:$0]  %s29, 1024, %s31, [#allocation6], 256, 256, 16
    $region9: #{tpu_custom_call.1} parent=1 // pred_fallthru
      _
    // Predicated region
    $region10: #{tpu_custom_call.1} parent=1 // pred_check
      _
    $region11: #{tpu_custom_call.1} parent=1 // pred_check_branch
      %38 = sbr.rel (0) target = $region13
    $region12: #{tpu_custom_call.1} parent=1 // pred_region
      %40 = vsyncadd [#allocation6], 0
      %s42 = sshll.u32 %s2, 4
      %s43 = int_to_ptr.hbm [resolvable:$true] %s42
      %s44 = sshll.u32 [#allocation7], 4
      %s45 = int_to_ptr.vmem [resolvable:$true] %s44
      %47 = dma.hbm_to_vmem [thread:$0]  %s43, 32, %s45, [#allocation6]
    $region13: #{tpu_custom_call.1} parent=1 // pred_fallthru
      _
    // Predicated region
    $region14: #{tpu_custom_call.1} parent=1 // pred_check
      _
    $region15: #{tpu_custom_call.1} parent=1 // pred_check_branch
      %49 = sbr.rel (0) target = $region17
    $region16: #{tpu_custom_call.1} parent=1 // pred_region
      %51 = dma.done [#allocation3], 256
    $region17: #{tpu_custom_call.1} parent=1 // pred_fallthru
      _
    // Predicated region
    $region18: #{tpu_custom_call.1} parent=1 // pred_check
      _
    $region19: #{tpu_custom_call.1} parent=1 // pred_check_branch
      %53 = sbr.rel (0) target = $region21
    $region20: #{tpu_custom_call.1} parent=1 // pred_region
      %55 = dma.done [#allocation6], 1024
    $region21: #{tpu_custom_call.1} parent=1 // pred_fallthru
      _
    // Predicated region
    $region22: #{tpu_custom_call.1} parent=1 // pred_check
      _
    $region23: #{tpu_custom_call.1} parent=1 // pred_check_branch
      %57 = sbr.rel (0) target = $region25
    $region24: #{tpu_custom_call.1} parent=1 // pred_region
      %59 = dma.done [#allocation6], 32
    $region25: #{tpu_custom_call.1} parent=1 // pred_fallthru
      _
    %v60 = vld [vmem:[#allocation2] sm:$0xff]
    %v61 = vld [vmem:[#allocation2 + $0x8] sm:$0xff]
    %v62 = vld [vmem:[#allocation5] sm:$0xff]
    %v63 = vld [vmem:[#allocation5 + $0x8] sm:$0xff]
    %v64 = vld [vmem:[#allocation5 + $0x10] sm:$0xff]
    %v65 = vld [vmem:[#allocation5 + $0x18] sm:$0xff]
    %v66 = vld [vmem:[#allocation5 + $0x20] sm:$0xff]
    %v67 = vld [vmem:[#allocation5 + $0x28] sm:$0xff]
    %v68 = vld [vmem:[#allocation5 + $0x30] sm:$0xff]
    %v69 = vld [vmem:[#allocation5 + $0x38] sm:$0xff]
    %v70 = vld [vmem:[#allocation7] sm:$0x3]
    %v72 = vperm.slane %v70, 0
    %v73 = vperm.slane %v70, 1
    %vm76 = vcmask 261120
    %v78 = vsel %vm76, %v60, 0
    %v81 = vsel %vm76, %v61, 0
    %83 = vmatpush.msra.mxu0 0.0
    %84 = vmatpush.msra.mxu0 0.0
    %85 = vmatpush.msra.mxu0 0.0
    %86 = vmatpush.msra.mxu0 0.0
    %87 = vmatpush.msra.mxu0 0.0
    %88 = vmatpush.msra.mxu0 0.0
    %89 = vmatpush.msra.mxu0 0.0
    %90 = vmatpush.msra.mxu0 0.0
    %91 = vmatpush.msra.mxu0 0.0
    %92 = vmatpush.msra.mxu0 0.0
    %93 = vmatpush.msra.mxu0 0.0
    %94 = vmatpush.msra.mxu0 0.0
    %95 = vmatpush.msra.mxu0 %v68
    %96 = vmatpush.msra.mxu0 %v66
    %97 = vmatpush.msra.mxu0 %v64
    %98 = vmatpush.msra.mxu0 %v62
    %99 = vmatmul.f32.gmra.mxu0 %v78
    %v100 = vpop.f32.mrf.mxu0
    %v101 = vadd.f32 %v72, %v100
    %102 = vmatmul.f32.gmra.mxu0 %v81
    %v103 = vpop.f32.mrf.mxu0
    %v104 = vadd.f32 %v72, %v103
    %105 = vdwg.mxu0
    %106 = vmatpush.msra.mxu0 0.0
    %107 = vmatpush.msra.mxu0 0.0
    %108 = vmatpush.msra.mxu0 0.0
    %109 = vmatpush.msra.mxu0 0.0
    %110 = vmatpush.msra.mxu0 0.0
    %111 = vmatpush.msra.mxu0 0.0
    %112 = vmatpush.msra.mxu0 0.0
    %113 = vmatpush.msra.mxu0 0.0
    %114 = vmatpush.msra.mxu0 0.0
    %115 = vmatpush.msra.mxu0 0.0
    %116 = vmatpush.msra.mxu0 0.0
    %117 = vmatpush.msra.mxu0 0.0
    %118 = vmatpush.msra.mxu0 %v69
    %119 = vmatpush.msra.mxu0 %v67
    %120 = vmatpush.msra.mxu0 %v65
    %121 = vmatpush.msra.mxu0 %v63
    %122 = vmatmul.f32.gmra.mxu0 %v78
    %v123 = vpop.f32.mrf.mxu0
    %v124 = vadd.f32 %v73, %v123
    %125 = vmatmul.f32.gmra.mxu0 %v81
    %v126 = vpop.f32.mrf.mxu0
    %v127 = vadd.f32 %v73, %v126
    %128 = vdwg.mxu0
    %129 = vst [vmem:[#allocation8] sm:$0xff] %v101
    %130 = vst [vmem:[#allocation8 + $0x8] sm:$0xff] %v124
    %131 = vst [vmem:[#allocation8 + $0x10] sm:$0xff] %v104
    %132 = vst [vmem:[#allocation8 + $0x18] sm:$0xff] %v127
    // Predicated region
    $region26: #{tpu_custom_call.1} parent=1 // pred_check
      _
    $region27: #{tpu_custom_call.1} parent=1 // pred_check_branch
      %134 = sbr.rel (0) target = $region29
    $region28: #{tpu_custom_call.1} parent=1 // pred_region
      %136 = vsyncadd [#allocation4], 0
      %s137 = sshll.u32 [#allocation8], 4
      %s138 = int_to_ptr.vmem [resolvable:$true] %s137
      %s139 = sshll.u32 %s3, 4
      %s140 = int_to_ptr.hbm [resolvable:$true] %s139
      %145 = dma.vmem_to_hbm [thread:$0]  %s138, 512, %s140, [#allocation4], 256, 256, 16
    $region29: #{tpu_custom_call.1} parent=1 // pred_fallthru
      _
    // Predicated region
    $region30: #{tpu_custom_call.1} parent=1 // pred_check
      _
    $region31: #{tpu_custom_call.1} parent=1 // pred_check_branch
      %147 = sbr.rel (0) target = $region33
    $region32: #{tpu_custom_call.1} parent=1 // pred_region
      %149 = dma.done [#allocation4], 512
    $region33: #{tpu_custom_call.1} parent=1 // pred_fallthru
      _
    %150 = vsyncpa [#allocation3], 1
    %151 = vsyncpa [#allocation6], 1
    %152 = vsyncpa [#allocation4], 1

</llo_original>
